<compile_context>
chip_gen: v6e
topology: v6e:2x2x1
jax: 0.10.0
libtpu: 0.0.40
codegen_flags: <defaults>
</compile_context>

<pallas_src>
import jax
import jax.numpy as jnp
from jax import lax
from jax.experimental import pallas as pl
from jax.experimental.pallas import tpu as pltpu


def _round_up(x, m):
    return ((x + m - 1) // m) * m


# ---------------------------------------------------------------------------
# Fused embedding-gather + flatten + Linear(S*D, 2) kernel (one batch tile).
# ---------------------------------------------------------------------------
def _discriminator_kernel(ids_ref, emb_ref, w_ref, b_ref, o_ref, acts_ref):
    # ids_ref  : VMEM (B_tile, S)   int32    token ids for this batch tile
    # emb_ref  : VMEM (V, D)        bf16     embedding table (grid-resident)
    # w_ref    : VMEM (S*D, 2)      bf16     cls weight, flattened-RHS layout
    # b_ref    : VMEM (1, 2)        f32      cls bias
    # o_ref    : VMEM (B_tile, 2)   f32      logits for this batch tile
    # acts_ref : VMEM (B_tile, S*D) bf16     gathered/flattened activation slab
    b_tile, seq_len = ids_ref.shape
    vocab, d_model = emb_ref.shape

    ids = ids_ref[...]                                    # (B_tile, S) int32
    emb_vals = emb_ref[...]                               # (V, D) bf16
    # Hoisted out of the loop (JAX does not CSE broadcast_in_dim).
    vocab_iota = lax.broadcasted_iota(jnp.int32, (b_tile, vocab), 1)

    # Vectorized one-hot gather: one (B_tile, V) @ (V, D) MXU matmul per token
    # position, written at a static column offset into the activation slab.
    # An out-of-range id yields an all-zero one-hot row (no OOB VMEM read).
    for s in range(seq_len):
        ids_col = ids[:, s:s + 1]                         # (B_tile, 1)
        onehot = (ids_col == vocab_iota).astype(emb_vals.dtype)   # (B_tile, V)
        rows = jnp.dot(onehot, emb_vals,
                       preferred_element_type=jnp.float32)        # (B_tile, D)
        acts_ref[:, s * d_model:(s + 1) * d_model] = rows.astype(acts_ref.dtype)

    # Single block-level classifier matmul: (B_tile, S*D) @ (S*D, 2), f32 acc.
    logits = jnp.dot(acts_ref[...], w_ref[...],
                     preferred_element_type=jnp.float32)          # (B_tile, 2)
    o_ref[...] = logits + b_ref[...]


def discriminator_forward(token_ids, params):
    """token_ids: (B, S) int tokens, S == max_label_length. Returns (B, 2) f32."""
    emb = params["embedding"].astype(jnp.bfloat16)        # (V, D)
    cls_w = params["cls_w"]                               # (2, S*D) torch layout
    cls_b = params["cls_b"]                               # (2,)

    B, S = token_ids.shape
    V, D = emb.shape
    assert cls_w.shape == (2, S * D), "seq_length must equal max_label_length"

    # Flattened lane-dense RHS for the single classifier matmul:
    # w_flat[s*D + d, c] == cls_w[c, s*D + d]  (matches torch flatten(1) order).
    w_flat = cls_w.T.astype(jnp.bfloat16)                 # (S*D, 2)
    bias = cls_b.reshape(1, 2).astype(jnp.float32)

    # Batch tiling: batch lives in the block; grid iterates over batch tiles.
    b_tile = 256 if B >= 256 else _round_up(B, 8)
    b_pad = _round_up(B, b_tile)
    ids = token_ids.astype(jnp.int32)
    if b_pad != B:
        ids = jnp.pad(ids, ((0, b_pad - B), (0, 0)))      # pad rows sliced off below
    grid = (b_pad // b_tile,)

    out = pl.pallas_call(
        _discriminator_kernel,
        out_shape=jax.ShapeDtypeStruct((b_pad, 2), jnp.float32),
        grid_spec=pltpu.PrefetchScalarGridSpec(
            num_scalar_prefetch=0,
            grid=grid,
            in_specs=[
                pl.BlockSpec((b_tile, S), lambda i: (i, 0)),      # token ids
                pl.BlockSpec((V, D), lambda i: (0, 0)),           # emb table (resident)
                pl.BlockSpec((S * D, 2), lambda i: (0, 0)),       # cls weight (resident)
                pl.BlockSpec((1, 2), lambda i: (0, 0)),           # cls bias (resident)
            ],
            out_specs=pl.BlockSpec((b_tile, 2), lambda i: (i, 0)),
            scratch_shapes=[pltpu.VMEM((b_tile, S * D), jnp.bfloat16)],
        ),
        compiler_params=pltpu.CompilerParams(
            dimension_semantics=("parallel",),   # each step owns its output tile
        ),
    )(ids, emb, w_flat, bias)
    return out[:B]


# ---------------------------------------------------------------------------
# Deterministic synthetic parameters (torch-like init).
# ---------------------------------------------------------------------------
def init_params(key, *, vocab_size, d_model, max_label_length):
    k_emb, k_w, k_b = jax.random.split(key, 3)
    embedding = jax.random.normal(k_emb, (vocab_size, d_model), jnp.float32)
    in_features = d_model * max_label_length
    bound = 1.0 / (in_features ** 0.5)
    cls_w = jax.random.uniform(k_w, (2, in_features), jnp.float32, -bound, bound)
    cls_b = jax.random.uniform(k_b, (2,), jnp.float32, -bound, bound)
    return {"embedding": embedding, "cls_w": cls_w, "cls_b": cls_b}


if __name__ == "__main__":
    # Small shapes consistent with the module:
    #   batch=2, seq_length == max_label_length = 8, d_model = 32, vocab = 16
    B, S, D, V = 2, 8, 32, 16

    key = jax.random.PRNGKey(0)
    k_ids, k_params = jax.random.split(key)
    token_ids = jax.random.randint(k_ids, (B, S), 0, V, dtype=jnp.int32)
    params = init_params(k_params, vocab_size=V, d_model=D, max_label_length=S)

    logits = discriminator_forward(token_ids, params)
    jax.block_until_ready(logits)

    # Pure-JAX reference of the same forward (embedding -> flatten -> linear),
    # using the same bf16-cast weights the kernel consumes (f32 accumulation).
    emb_bf = params["embedding"].astype(jnp.bfloat16).astype(jnp.float32)
    w_bf = params["cls_w"].astype(jnp.bfloat16).astype(jnp.float32)
    gathered = emb_bf[token_ids]                                   # (B, S, D)
    ref = gathered.reshape(B, S * D) @ w_bf.T + params["cls_b"]    # (B, 2)

    assert logits.shape == (B, 2)
    assert jnp.allclose(logits, ref, atol=2e-3, rtol=2e-3), "mismatch vs reference"

    # TODO(synk): self.encoder (TransformerEncoder) and self.residual are unused
    # in Discriminator.forward, so they are intentionally not implemented.
    print("KERNEL_OK")
</pallas_src>

<mosaic_0001>
module attributes {stable_mosaic.version = 11 : i64} {
  func.func @_discriminator_kernel(%arg0: i32, %arg1: memref<8x8xi32, #tpu.memory_space<vmem>>, %arg2: memref<16x32xbf16, #tpu.memory_space<vmem>>, %arg3: memref<256x2xbf16, #tpu.memory_space<vmem>>, %arg4: memref<1x2xf32, #tpu.memory_space<vmem>>, %arg5: memref<8x2xf32, #tpu.memory_space<vmem>>, %arg6: memref<8x256xbf16, #tpu.memory_space<vmem>>) attributes {dimension_semantics = [#tpu.dimension_semantics<parallel>], iteration_bounds = array<i64: 1>, scalar_prefetch = 0 : i64, scratch_operands = 1 : i64, tpu.core_type = #tpu.core_type<tc>, window_params = [{transform_indices = @transform_0, window_bounds = array<i64: 8, 8>}, {pipeline_mode = #tpu.pipeline_mode<synchronous>, transform_indices = @transform_1, window_bounds = array<i64: 16, 32>}, {pipeline_mode = #tpu.pipeline_mode<synchronous>, transform_indices = @transform_2, window_bounds = array<i64: 256, 2>}, {pipeline_mode = #tpu.pipeline_mode<synchronous>, transform_indices = @transform_3, window_bounds = array<i64: 1, 2>}, {transform_indices = @transform_4, window_bounds = array<i64: 8, 2>}]} {
    %c0 = arith.constant 0 : index
    %c0_0 = arith.constant 0 : index
    %0 = vector.load %arg1[%c0, %c0_0] : memref<8x8xi32, #tpu.memory_space<vmem>>, vector<8x8xi32>
    %c0_1 = arith.constant 0 : index
    %c0_2 = arith.constant 0 : index
    %1 = vector.load %arg2[%c0_1, %c0_2] : memref<16x32xbf16, #tpu.memory_space<vmem>>, vector<16x32xbf16>
    %2 = tpu.iota {dimensions = array<i32: 1>} : vector<8x16xi32>
    %3 = vector.extract_strided_slice %0 {offsets = [0, 0], sizes = [8, 1], strides = [1, 1]} : vector<8x8xi32> to vector<8x1xi32>
    %4 = vector.broadcast %3 : vector<8x1xi32> to vector<8x16xi32>
    %5 = arith.cmpi eq, %4, %2 : vector<8x16xi32>
    %6 = arith.extui %5 : vector<8x16xi1> to vector<8x16xi32>
    %7 = arith.sitofp %6 : vector<8x16xi32> to vector<8x16xf32>
    %8 = arith.truncf %7 : vector<8x16xf32> to vector<8x16xbf16>
    %cst = arith.constant dense<0.000000e+00> : vector<8x32xf32>
    %9 = tpu.matmul %8, %1, %cst {dimension_numbers = #tpu.dot_dimension_numbers<[1], [0], [0], [1], [0, 0, 1, 1], [], []>} : vector<8x16xbf16>, vector<16x32xbf16>, vector<8x32xf32> -> vector<8x32xf32>
    %10 = arith.truncf %9 : vector<8x32xf32> to vector<8x32xbf16>
    %c0_3 = arith.constant 0 : index
    %c0_4 = arith.constant 0 : index
    %11 = vector.load %arg6[%c0_3, %c0_4] : memref<8x256xbf16, #tpu.memory_space<vmem>>, vector<8x32xbf16>
    tpu.vector_store %arg6[%c0_3, %c0_4], %10 {strides = array<i32>} : memref<8x256xbf16, #tpu.memory_space<vmem>>, vector<8x32xbf16>,
    %12 = vector.extract_strided_slice %0 {offsets = [0, 1], sizes = [8, 1], strides = [1, 1]} : vector<8x8xi32> to vector<8x1xi32>
    %13 = vector.broadcast %12 : vector<8x1xi32> to vector<8x16xi32>
    %14 = arith.cmpi eq, %13, %2 : vector<8x16xi32>
    %15 = arith.extui %14 : vector<8x16xi1> to vector<8x16xi32>
    %16 = arith.sitofp %15 : vector<8x16xi32> to vector<8x16xf32>
    %17 = arith.truncf %16 : vector<8x16xf32> to vector<8x16xbf16>
    %cst_5 = arith.constant dense<0.000000e+00> : vector<8x32xf32>
    %18 = tpu.matmul %17, %1, %cst_5 {dimension_numbers = #tpu.dot_dimension_numbers<[1], [0], [0], [1], [0, 0, 1, 1], [], []>} : vector<8x16xbf16>, vector<16x32xbf16>, vector<8x32xf32> -> vector<8x32xf32>
    %19 = arith.truncf %18 : vector<8x32xf32> to vector<8x32xbf16>
    %c0_6 = arith.constant 0 : index
    %c32 = arith.constant 32 : index
    %20 = vector.load %arg6[%c0_6, %c32] : memref<8x256xbf16, #tpu.memory_space<vmem>>, vector<8x32xbf16>
    tpu.vector_store %arg6[%c0_6, %c32], %19 {strides = array<i32>} : memref<8x256xbf16, #tpu.memory_space<vmem>>, vector<8x32xbf16>,
    %21 = vector.extract_strided_slice %0 {offsets = [0, 2], sizes = [8, 1], strides = [1, 1]} : vector<8x8xi32> to vector<8x1xi32>
    %22 = vector.broadcast %21 : vector<8x1xi32> to vector<8x16xi32>
    %23 = arith.cmpi eq, %22, %2 : vector<8x16xi32>
    %24 = arith.extui %23 : vector<8x16xi1> to vector<8x16xi32>
    %25 = arith.sitofp %24 : vector<8x16xi32> to vector<8x16xf32>
    %26 = arith.truncf %25 : vector<8x16xf32> to vector<8x16xbf16>
    %cst_7 = arith.constant dense<0.000000e+00> : vector<8x32xf32>
    %27 = tpu.matmul %26, %1, %cst_7 {dimension_numbers = #tpu.dot_dimension_numbers<[1], [0], [0], [1], [0, 0, 1, 1], [], []>} : vector<8x16xbf16>, vector<16x32xbf16>, vector<8x32xf32> -> vector<8x32xf32>
    %28 = arith.truncf %27 : vector<8x32xf32> to vector<8x32xbf16>
    %c0_8 = arith.constant 0 : index
    %c64 = arith.constant 64 : index
    %29 = vector.load %arg6[%c0_8, %c64] : memref<8x256xbf16, #tpu.memory_space<vmem>>, vector<8x32xbf16>
    tpu.vector_store %arg6[%c0_8, %c64], %28 {strides = array<i32>} : memref<8x256xbf16, #tpu.memory_space<vmem>>, vector<8x32xbf16>,
    %30 = vector.extract_strided_slice %0 {offsets = [0, 3], sizes = [8, 1], strides = [1, 1]} : vector<8x8xi32> to vector<8x1xi32>
    %31 = vector.broadcast %30 : vector<8x1xi32> to vector<8x16xi32>
    %32 = arith.cmpi eq, %31, %2 : vector<8x16xi32>
    %33 = arith.extui %32 : vector<8x16xi1> to vector<8x16xi32>
    %34 = arith.sitofp %33 : vector<8x16xi32> to vector<8x16xf32>
    %35 = arith.truncf %34 : vector<8x16xf32> to vector<8x16xbf16>
    %cst_9 = arith.constant dense<0.000000e+00> : vector<8x32xf32>
    %36 = tpu.matmul %35, %1, %cst_9 {dimension_numbers = #tpu.dot_dimension_numbers<[1], [0], [0], [1], [0, 0, 1, 1], [], []>} : vector<8x16xbf16>, vector<16x32xbf16>, vector<8x32xf32> -> vector<8x32xf32>
    %37 = arith.truncf %36 : vector<8x32xf32> to vector<8x32xbf16>
    %c0_10 = arith.constant 0 : index
    %c96 = arith.constant 96 : index
    %38 = vector.load %arg6[%c0_10, %c96] : memref<8x256xbf16, #tpu.memory_space<vmem>>, vector<8x32xbf16>
    tpu.vector_store %arg6[%c0_10, %c96], %37 {strides = array<i32>} : memref<8x256xbf16, #tpu.memory_space<vmem>>, vector<8x32xbf16>,
    %39 = vector.extract_strided_slice %0 {offsets = [0, 4], sizes = [8, 1], strides = [1, 1]} : vector<8x8xi32> to vector<8x1xi32>
    %40 = vector.broadcast %39 : vector<8x1xi32> to vector<8x16xi32>
    %41 = arith.cmpi eq, %40, %2 : vector<8x16xi32>
    %42 = arith.extui %41 : vector<8x16xi1> to vector<8x16xi32>
    %43 = arith.sitofp %42 : vector<8x16xi32> to vector<8x16xf32>
    %44 = arith.truncf %43 : vector<8x16xf32> to vector<8x16xbf16>
    %cst_11 = arith.constant dense<0.000000e+00> : vector<8x32xf32>
    %45 = tpu.matmul %44, %1, %cst_11 {dimension_numbers = #tpu.dot_dimension_numbers<[1], [0], [0], [1], [0, 0, 1, 1], [], []>} : vector<8x16xbf16>, vector<16x32xbf16>, vector<8x32xf32> -> vector<8x32xf32>
    %46 = arith.truncf %45 : vector<8x32xf32> to vector<8x32xbf16>
    %c0_12 = arith.constant 0 : index
    %c128 = arith.constant 128 : index
    %47 = vector.load %arg6[%c0_12, %c128] : memref<8x256xbf16, #tpu.memory_space<vmem>>, vector<8x32xbf16>
    tpu.vector_store %arg6[%c0_12, %c128], %46 {strides = array<i32>} : memref<8x256xbf16, #tpu.memory_space<vmem>>, vector<8x32xbf16>,
    %48 = vector.extract_strided_slice %0 {offsets = [0, 5], sizes = [8, 1], strides = [1, 1]} : vector<8x8xi32> to vector<8x1xi32>
    %49 = vector.broadcast %48 : vector<8x1xi32> to vector<8x16xi32>
    %50 = arith.cmpi eq, %49, %2 : vector<8x16xi32>
    %51 = arith.extui %50 : vector<8x16xi1> to vector<8x16xi32>
    %52 = arith.sitofp %51 : vector<8x16xi32> to vector<8x16xf32>
    %53 = arith.truncf %52 : vector<8x16xf32> to vector<8x16xbf16>
    %cst_13 = arith.constant dense<0.000000e+00> : vector<8x32xf32>
    %54 = tpu.matmul %53, %1, %cst_13 {dimension_numbers = #tpu.dot_dimension_numbers<[1], [0], [0], [1], [0, 0, 1, 1], [], []>} : vector<8x16xbf16>, vector<16x32xbf16>, vector<8x32xf32> -> vector<8x32xf32>
    %55 = arith.truncf %54 : vector<8x32xf32> to vector<8x32xbf16>
    %c0_14 = arith.constant 0 : index
    %c160 = arith.constant 160 : index
    %56 = vector.load %arg6[%c0_14, %c160] : memref<8x256xbf16, #tpu.memory_space<vmem>>, vector<8x32xbf16>
    tpu.vector_store %arg6[%c0_14, %c160], %55 {strides = array<i32>} : memref<8x256xbf16, #tpu.memory_space<vmem>>, vector<8x32xbf16>,
    %57 = vector.extract_strided_slice %0 {offsets = [0, 6], sizes = [8, 1], strides = [1, 1]} : vector<8x8xi32> to vector<8x1xi32>
    %58 = vector.broadcast %57 : vector<8x1xi32> to vector<8x16xi32>
    %59 = arith.cmpi eq, %58, %2 : vector<8x16xi32>
    %60 = arith.extui %59 : vector<8x16xi1> to vector<8x16xi32>
    %61 = arith.sitofp %60 : vector<8x16xi32> to vector<8x16xf32>
    %62 = arith.truncf %61 : vector<8x16xf32> to vector<8x16xbf16>
    %cst_15 = arith.constant dense<0.000000e+00> : vector<8x32xf32>
    %63 = tpu.matmul %62, %1, %cst_15 {dimension_numbers = #tpu.dot_dimension_numbers<[1], [0], [0], [1], [0, 0, 1, 1], [], []>} : vector<8x16xbf16>, vector<16x32xbf16>, vector<8x32xf32> -> vector<8x32xf32>
    %64 = arith.truncf %63 : vector<8x32xf32> to vector<8x32xbf16>
    %c0_16 = arith.constant 0 : index
    %c192 = arith.constant 192 : index
    %65 = vector.load %arg6[%c0_16, %c192] : memref<8x256xbf16, #tpu.memory_space<vmem>>, vector<8x32xbf16>
    tpu.vector_store %arg6[%c0_16, %c192], %64 {strides = array<i32>} : memref<8x256xbf16, #tpu.memory_space<vmem>>, vector<8x32xbf16>,
    %66 = vector.extract_strided_slice %0 {offsets = [0, 7], sizes = [8, 1], strides = [1, 1]} : vector<8x8xi32> to vector<8x1xi32>
    %67 = vector.broadcast %66 : vector<8x1xi32> to vector<8x16xi32>
    %68 = arith.cmpi eq, %67, %2 : vector<8x16xi32>
    %69 = arith.extui %68 : vector<8x16xi1> to vector<8x16xi32>
    %70 = arith.sitofp %69 : vector<8x16xi32> to vector<8x16xf32>
    %71 = arith.truncf %70 : vector<8x16xf32> to vector<8x16xbf16>
    %cst_17 = arith.constant dense<0.000000e+00> : vector<8x32xf32>
    %72 = tpu.matmul %71, %1, %cst_17 {dimension_numbers = #tpu.dot_dimension_numbers<[1], [0], [0], [1], [0, 0, 1, 1], [], []>} : vector<8x16xbf16>, vector<16x32xbf16>, vector<8x32xf32> -> vector<8x32xf32>
    %73 = arith.truncf %72 : vector<8x32xf32> to vector<8x32xbf16>
    %c0_18 = arith.constant 0 : index
    %c224 = arith.constant 224 : index
    %74 = vector.load %arg6[%c0_18, %c224] : memref<8x256xbf16, #tpu.memory_space<vmem>>, vector<8x32xbf16>
    tpu.vector_store %arg6[%c0_18, %c224], %73 {strides = array<i32>} : memref<8x256xbf16, #tpu.memory_space<vmem>>, vector<8x32xbf16>,
    %c0_19 = arith.constant 0 : index
    %c0_20 = arith.constant 0 : index
    %75 = vector.load %arg6[%c0_19, %c0_20] : memref<8x256xbf16, #tpu.memory_space<vmem>>, vector<8x256xbf16>
    %c0_21 = arith.constant 0 : index
    %c0_22 = arith.constant 0 : index
    %76 = vector.load %arg3[%c0_21, %c0_22] : memref<256x2xbf16, #tpu.memory_space<vmem>>, vector<256x2xbf16>
    %cst_23 = arith.constant dense<0.000000e+00> : vector<8x2xf32>
    %77 = tpu.matmul %75, %76, %cst_23 {dimension_numbers = #tpu.dot_dimension_numbers<[1], [0], [0], [1], [0, 0, 1, 1], [], []>} : vector<8x256xbf16>, vector<256x2xbf16>, vector<8x2xf32> -> vector<8x2xf32>
    %c0_24 = arith.constant 0 : index
    %c0_25 = arith.constant 0 : index
    %78 = vector.load %arg4[%c0_24, %c0_25] : memref<1x2xf32, #tpu.memory_space<vmem>>, vector<1x2xf32>
    %79 = vector.broadcast %78 : vector<1x2xf32> to vector<8x2xf32>
    %80 = arith.addf %77, %79 : vector<8x2xf32>
    %c0_26 = arith.constant 0 : index
    %c0_27 = arith.constant 0 : index
    %81 = vector.load %arg5[%c0_26, %c0_27] : memref<8x2xf32, #tpu.memory_space<vmem>>, vector<8x2xf32>
    tpu.vector_store %arg5[%c0_26, %c0_27], %80 {strides = array<i32>} : memref<8x2xf32, #tpu.memory_space<vmem>>, vector<8x2xf32>,
    return
  }
  func.func @transform_0(%arg0: i32) -> (i32, i32) {
    %c0_i32 = arith.constant 0 : i32
    %c0_i32_0 = arith.constant 0 : i32
    return %arg0, %c0_i32 : i32, i32
  }
  func.func @transform_1(%arg0: i32) -> (i32, i32) {
    %c0_i32 = arith.constant 0 : i32
    %c0_i32_0 = arith.constant 0 : i32
    %c0_i32_1 = arith.constant 0 : i32
    return %c0_i32, %c0_i32_0 : i32, i32
  }
  func.func @transform_2(%arg0: i32) -> (i32, i32) {
    %c0_i32 = arith.constant 0 : i32
    %c0_i32_0 = arith.constant 0 : i32
    %c0_i32_1 = arith.constant 0 : i32
    return %c0_i32, %c0_i32_0 : i32, i32
  }
  func.func @transform_3(%arg0: i32) -> (i32, i32) {
    %c0_i32 = arith.constant 0 : i32
    %c0_i32_0 = arith.constant 0 : i32
    %c0_i32_1 = arith.constant 0 : i32
    return %c0_i32, %c0_i32_0 : i32, i32
  }
  func.func @transform_4(%arg0: i32) -> (i32, i32) {
    %c0_i32 = arith.constant 0 : i32
    %c0_i32_0 = arith.constant 0 : i32
    return %arg0, %c0_i32 : i32, i32
  }
}

</mosaic_0001>

<llo_original>
// kernel: tpu_custom_call.1
$region0: #{tpu_custom_call.1}
  #allocation0 [shape = 'u32[]', space=smem, size = 0x4, offset = 0x4, fixed_abs, tag = 'smem constant byte address 0x4 - core index']
  #allocation1 [shape = 'u32[144,128]{1,0:T(1,128)}', space=vmem, size = 0x12000, scoped, tag = 'internal scratch']
  #allocation2 [shape = 'bf16[8,256]{1,0:T(8,128)(2,1)}', space=vmem, size = 0x1000, scoped, tag = 'scratch operand']
  %s0 = inlined_call_operand.vmem [shape: s32[8,8], index: 0, kind: input, shape index: {}]
  %s1 = inlined_call_operand.vmem [shape: bf16[16,32], index: 1, kind: input, shape index: {}]
  %s2 = inlined_call_operand.vmem [shape: bf16[256,2], index: 2, kind: input, shape index: {}]
  %s3 = inlined_call_operand.vmem [shape: f32[1,2], index: 3, kind: input, shape index: {}]
  %s4 = inlined_call_operand.vmem [shape: f32[8,2], index: 4, kind: output, shape index: {}]
  %s5 = sld [smem:[#allocation0]]
  $region26: #{tpu_custom_call.1} parent=0
    _
  %s7 = ssub.s32 1, %s5
  %s8 = scalar_select 0, %s7, %s5
  // Predicated region
  $region2: #{tpu_custom_call.1} parent=0 // pred_check
    _
  $region3: #{tpu_custom_call.1} parent=0 // pred_check_branch
    %10 = sbr.rel (0) target = $region5
  $region4: #{tpu_custom_call.1} parent=0 // pred_region
    _
  $region5: #{tpu_custom_call.1} parent=0 // pred_fallthru
    _
  // Predicated region
  $region6: #{tpu_custom_call.1} parent=0 // pred_check
    _
  $region7: #{tpu_custom_call.1} parent=0 // pred_check_branch
    %12 = sbr.rel (0) target = $region9
  $region8: #{tpu_custom_call.1} parent=0 // pred_region
    _
  $region9: #{tpu_custom_call.1} parent=0 // pred_fallthru
    _
  // Predicated region
  $region10: #{tpu_custom_call.1} parent=0 // pred_check
    _
  $region11: #{tpu_custom_call.1} parent=0 // pred_check_branch
    %14 = sbr.rel (0) target = $region13
  $region12: #{tpu_custom_call.1} parent=0 // pred_region
    _
  $region13: #{tpu_custom_call.1} parent=0 // pred_fallthru
    _
  // Predicated region
  $region14: #{tpu_custom_call.1} parent=0 // pred_check
    _
  $region15: #{tpu_custom_call.1} parent=0 // pred_check_branch
    %16 = sbr.rel (0) target = $region17
  $region16: #{tpu_custom_call.1} parent=0 // pred_region
    _
  $region17: #{tpu_custom_call.1} parent=0 // pred_fallthru
    _
  %v18 = vld [vmem:[%s0] sm:$0xff]
  %v19 = vld [vmem:[%s1] sm:$0xf]
  %v20 = vld [vmem:[%s1 + $0x4] sm:$0xf]
  %v21 = vlaneseq
  %v22 = vand.u32 %v21, 127
  %23 = vset.pattern.permute.xlu0 0
  %24 = vperm.xlu0 %23, %v18
  %v25 = vpop.permute.xlu0 %24
  %vm26 = vcmp.eq.s32.totalorder %v25, %v22
  %v27 = vsel %vm26, 1, 0
  %v28 = vcvt.s32.f32 %v27
  %v29 = vpack.c.bf16 %v28, %v28
  %v32 = vunpack.c.l.b16 %v19
  %v33 = vunpack.c.l.b16 %v20
  %v34 = vpack.c.b16 %v33, %v32
  %vm36 = vcmask 130048
  %v38 = vsel %vm36, %v29, 0
  %40 = vmatprep.subr.bf16.mxu0 0
  %41 = vmatpush1.bf16.msra.mxu0 0
  %42 = vmatprep.subr.bf16.mxu0 0
  %43 = vmatpush1.bf16.msra.mxu0 0
  %44 = vmatprep.subr.bf16.mxu0 0
  %45 = vmatpush1.bf16.msra.mxu0 0
  %46 = vmatprep.subr.bf16.mxu0 0
  %47 = vmatpush1.bf16.msra.mxu0 0
  %48 = vmatprep.subr.bf16.mxu0 0
  %49 = vmatpush1.bf16.msra.mxu0 0
  %50 = vmatprep.subr.bf16.mxu0 0
  %51 = vmatpush1.bf16.msra.mxu0 0
  %52 = vmatprep.subr.bf16.mxu0 0
  %53 = vmatpush1.bf16.msra.mxu0 0
  %54 = vmatprep.subr.bf16.mxu0 0
  %55 = vmatpush1.bf16.msra.mxu0 %v34
  %56 = vmatprep.subr.bf16.mxu0 0
  %57 = vmatpush2.bf16.msra.mxu0 0
  %58 = vmatprep.subr.bf16.mxu0 0
  %59 = vmatpush2.bf16.msra.mxu0 0
  %60 = vmatprep.subr.bf16.mxu0 0
  %61 = vmatpush2.bf16.msra.mxu0 0
  %62 = vmatprep.subr.bf16.mxu0 0
  %63 = vmatpush2.bf16.msra.mxu0 0
  %64 = vmatprep.subr.bf16.mxu0 0
  %65 = vmatpush2.bf16.msra.mxu0 0
  %66 = vmatprep.subr.bf16.mxu0 0
  %67 = vmatpush2.bf16.msra.mxu0 0
  %68 = vmatprep.subr.bf16.mxu0 0
  %69 = vmatpush2.bf16.msra.mxu0 0
  %70 = vmatprep.subr.bf16.mxu0 0
  %71 = vmatpush2.bf16.msra.mxu0 0
  %72 = vmatprep.mubr.bf16.mxu0 0
  %73 = vmatmul.mubr.bf16.gmra.mxu0 %v38
  %v74 = vpop.f32.mrf.mxu0
  %v75 = vadd.f32 0.0, %v74
  %v76 = vpop.f32.mrf.mxu0
  %v77 = vpop.f32.mrf.mxu0
  %v78 = vpop.f32.mrf.mxu0
  %79 = vdwg.mxu0
  %v80 = vpack.c.bf16 %v75, %v75
  %vm81 = vcmask 257024
  %82 = vst.msk [vmem:[#allocation2] sm:$0xf] %vm81, %v80
  %83 = vset.pattern.permute.xlu0 1
  %84 = vperm.xlu0 %83, %v18
  %v85 = vpop.permute.xlu0 %84
  %vm86 = vcmp.eq.s32.totalorder %v85, %v22
  %v87 = vsel %vm86, 1, 0
  %v88 = vcvt.s32.f32 %v87
  %v89 = vpack.c.bf16 %v88, %v88
  %v91 = vsel %vm36, %v89, 0
  %93 = vmatprep.subr.bf16.mxu0 0
  %94 = vmatpush1.bf16.msra.mxu0 0
  %95 = vmatprep.subr.bf16.mxu0 0
  %96 = vmatpush1.bf16.msra.mxu0 0
  %97 = vmatprep.subr.bf16.mxu0 0
  %98 = vmatpush1.bf16.msra.mxu0 0
  %99 = vmatprep.subr.bf16.mxu0 0
  %100 = vmatpush1.bf16.msra.mxu0 0
  %101 = vmatprep.subr.bf16.mxu0 0
  %102 = vmatpush1.bf16.msra.mxu0 0
  %103 = vmatprep.subr.bf16.mxu0 0
  %104 = vmatpush1.bf16.msra.mxu0 0
  %105 = vmatprep.subr.bf16.mxu0 0
  %106 = vmatpush1.bf16.msra.mxu0 0
  %107 = vmatprep.subr.bf16.mxu0 0
  %108 = vmatpush1.bf16.msra.mxu0 %v34
  %109 = vmatprep.subr.bf16.mxu0 0
  %110 = vmatpush2.bf16.msra.mxu0 0
  %111 = vmatprep.subr.bf16.mxu0 0
  %112 = vmatpush2.bf16.msra.mxu0 0
  %113 = vmatprep.subr.bf16.mxu0 0
  %114 = vmatpush2.bf16.msra.mxu0 0
  %115 = vmatprep.subr.bf16.mxu0 0
  %116 = vmatpush2.bf16.msra.mxu0 0
  %117 = vmatprep.subr.bf16.mxu0 0
  %118 = vmatpush2.bf16.msra.mxu0 0
  %119 = vmatprep.subr.bf16.mxu0 0
  %120 = vmatpush2.bf16.msra.mxu0 0
  %121 = vmatprep.subr.bf16.mxu0 0
  %122 = vmatpush2.bf16.msra.mxu0 0
  %123 = vmatprep.subr.bf16.mxu0 0
  %124 = vmatpush2.bf16.msra.mxu0 0
  %125 = vmatprep.mubr.bf16.mxu0 0
  %126 = vmatmul.mubr.bf16.gmra.mxu0 %v91
  %v127 = vpop.f32.mrf.mxu0
  %v128 = vadd.f32 0.0, %v127
  %v129 = vpop.f32.mrf.mxu0
  %v130 = vpop.f32.mrf.mxu0
  %v131 = vpop.f32.mrf.mxu0
  %132 = vdwg.mxu0
  %v133 = vpack.c.bf16 %v128, %v128
  %v135 = vunpack.c.l.b16 %v133
  %v136 = vpack.c.b16 %v135, %v135
  %137 = vrot.lane.b32.xlu0 %v136, 32
  %v138 = vpop.permute.xlu0 %137
  %vm140 = vcmask 519424
  %141 = vst.msk [vmem:[#allocation2] sm:$0xf] %vm140, %v138
  %142 = vset.pattern.permute.xlu0 2
  %143 = vperm.xlu0 %142, %v18
  %v144 = vpop.permute.xlu0 %143
  %vm145 = vcmp.eq.s32.totalorder %v144, %v22
  %v146 = vsel %vm145, 1, 0
  %v147 = vcvt.s32.f32 %v146
  %v148 = vpack.c.bf16 %v147, %v147
  %v150 = vsel %vm36, %v148, 0
  %152 = vmatprep.subr.bf16.mxu0 0
  %153 = vmatpush1.bf16.msra.mxu0 0
  %154 = vmatprep.subr.bf16.mxu0 0
  %155 = vmatpush1.bf16.msra.mxu0 0
  %156 = vmatprep.subr.bf16.mxu0 0
  %157 = vmatpush1.bf16.msra.mxu0 0
  %158 = vmatprep.subr.bf16.mxu0 0
  %159 = vmatpush1.bf16.msra.mxu0 0
  %160 = vmatprep.subr.bf16.mxu0 0
  %161 = vmatpush1.bf16.msra.mxu0 0
  %162 = vmatprep.subr.bf16.mxu0 0
  %163 = vmatpush1.bf16.msra.mxu0 0
  %164 = vmatprep.subr.bf16.mxu0 0
  %165 = vmatpush1.bf16.msra.mxu0 0
  %166 = vmatprep.subr.bf16.mxu0 0
  %167 = vmatpush1.bf16.msra.mxu0 %v34
  %168 = vmatprep.subr.bf16.mxu0 0
  %169 = vmatpush2.bf16.msra.mxu0 0
  %170 = vmatprep.subr.bf16.mxu0 0
  %171 = vmatpush2.bf16.msra.mxu0 0
  %172 = vmatprep.subr.bf16.mxu0 0
  %173 = vmatpush2.bf16.msra.mxu0 0
  %174 = vmatprep.subr.bf16.mxu0 0
  %175 = vmatpush2.bf16.msra.mxu0 0
  %176 = vmatprep.subr.bf16.mxu0 0
  %177 = vmatpush2.bf16.msra.mxu0 0
  %178 = vmatprep.subr.bf16.mxu0 0
  %179 = vmatpush2.bf16.msra.mxu0 0
  %180 = vmatprep.subr.bf16.mxu0 0
  %181 = vmatpush2.bf16.msra.mxu0 0
  %182 = vmatprep.subr.bf16.mxu0 0
  %183 = vmatpush2.bf16.msra.mxu0 0
  %184 = vmatprep.mubr.bf16.mxu0 0
  %185 = vmatmul.mubr.bf16.gmra.mxu0 %v150
  %v186 = vpop.f32.mrf.mxu0
  %v187 = vadd.f32 0.0, %v186
  %v188 = vpop.f32.mrf.mxu0
  %v189 = vpop.f32.mrf.mxu0
  %v190 = vpop.f32.mrf.mxu0
  %191 = vdwg.mxu0
  %v192 = vpack.c.bf16 %v187, %v187
  %v194 = vunpack.c.l.b16 %v192
  %v195 = vpack.c.b16 %v194, %v194
  %196 = vrot.lane.b32.xlu0 %v195, 64
  %v197 = vpop.permute.xlu0 %196
  %vm199 = vcmask 781824
  %200 = vst.msk [vmem:[#allocation2] sm:$0xf] %vm199, %v197
  %201 = vset.pattern.permute.xlu0 3
  %202 = vperm.xlu0 %201, %v18
  %v203 = vpop.permute.xlu0 %202
  %vm204 = vcmp.eq.s32.totalorder %v203, %v22
  %v205 = vsel %vm204, 1, 0
  %v206 = vcvt.s32.f32 %v205
  %v207 = vpack.c.bf16 %v206, %v206
  %v209 = vsel %vm36, %v207, 0
  %211 = vmatprep.subr.bf16.mxu0 0
  %212 = vmatpush1.bf16.msra.mxu0 0
  %213 = vmatprep.subr.bf16.mxu0 0
  %214 = vmatpush1.bf16.msra.mxu0 0
  %215 = vmatprep.subr.bf16.mxu0 0
  %216 = vmatpush1.bf16.msra.mxu0 0
  %217 = vmatprep.subr.bf16.mxu0 0
  %218 = vmatpush1.bf16.msra.mxu0 0
  %219 = vmatprep.subr.bf16.mxu0 0
  %220 = vmatpush1.bf16.msra.mxu0 0
  %221 = vmatprep.subr.bf16.mxu0 0
  %222 = vmatpush1.bf16.msra.mxu0 0
  %223 = vmatprep.subr.bf16.mxu0 0
  %224 = vmatpush1.bf16.msra.mxu0 0
  %225 = vmatprep.subr.bf16.mxu0 0
  %226 = vmatpush1.bf16.msra.mxu0 %v34
  %227 = vmatprep.subr.bf16.mxu0 0
  %228 = vmatpush2.bf16.msra.mxu0 0
  %229 = vmatprep.subr.bf16.mxu0 0
  %230 = vmatpush2.bf16.msra.mxu0 0
  %231 = vmatprep.subr.bf16.mxu0 0
  %232 = vmatpush2.bf16.msra.mxu0 0
  %233 = vmatprep.subr.bf16.mxu0 0
  %234 = vmatpush2.bf16.msra.mxu0 0
  %235 = vmatprep.subr.bf16.mxu0 0
  %236 = vmatpush2.bf16.msra.mxu0 0
  %237 = vmatprep.subr.bf16.mxu0 0
  %238 = vmatpush2.bf16.msra.mxu0 0
  %239 = vmatprep.subr.bf16.mxu0 0
  %240 = vmatpush2.bf16.msra.mxu0 0
  %241 = vmatprep.subr.bf16.mxu0 0
  %242 = vmatpush2.bf16.msra.mxu0 0
  %243 = vmatprep.mubr.bf16.mxu0 0
  %244 = vmatmul.mubr.bf16.gmra.mxu0 %v209
  %v245 = vpop.f32.mrf.mxu0
  %v246 = vadd.f32 0.0, %v245
  %v247 = vpop.f32.mrf.mxu0
  %v248 = vpop.f32.mrf.mxu0
  %v249 = vpop.f32.mrf.mxu0
  %250 = vdwg.mxu0
  %v251 = vpack.c.bf16 %v246, %v246
  %v253 = vunpack.c.l.b16 %v251
  %v254 = vpack.c.b16 %v253, %v253
  %255 = vrot.lane.b32.xlu0 %v254, 96
  %v256 = vpop.permute.xlu0 %255
  %vm258 = vcmask 1044224
  %259 = vst.msk [vmem:[#allocation2] sm:$0xf] %vm258, %v256
  %260 = vset.pattern.permute.xlu0 4
  %261 = vperm.xlu0 %260, %v18
  %v262 = vpop.permute.xlu0 %261
  %vm263 = vcmp.eq.s32.totalorder %v262, %v22
  %v264 = vsel %vm263, 1, 0
  %v265 = vcvt.s32.f32 %v264
  %v266 = vpack.c.bf16 %v265, %v265
  %v268 = vsel %vm36, %v266, 0
  %270 = vmatprep.subr.bf16.mxu0 0
  %271 = vmatpush1.bf16.msra.mxu0 0
  %272 = vmatprep.subr.bf16.mxu0 0
  %273 = vmatpush1.bf16.msra.mxu0 0
  %274 = vmatprep.subr.bf16.mxu0 0
  %275 = vmatpush1.bf16.msra.mxu0 0
  %276 = vmatprep.subr.bf16.mxu0 0
  %277 = vmatpush1.bf16.msra.mxu0 0
  %278 = vmatprep.subr.bf16.mxu0 0
  %279 = vmatpush1.bf16.msra.mxu0 0
  %280 = vmatprep.subr.bf16.mxu0 0
  %281 = vmatpush1.bf16.msra.mxu0 0
  %282 = vmatprep.subr.bf16.mxu0 0
  %283 = vmatpush1.bf16.msra.mxu0 0
  %284 = vmatprep.subr.bf16.mxu0 0
  %285 = vmatpush1.bf16.msra.mxu0 %v34
  %286 = vmatprep.subr.bf16.mxu0 0
  %287 = vmatpush2.bf16.msra.mxu0 0
  %288 = vmatprep.subr.bf16.mxu0 0
  %289 = vmatpush2.bf16.msra.mxu0 0
  %290 = vmatprep.subr.bf16.mxu0 0
  %291 = vmatpush2.bf16.msra.mxu0 0
  %292 = vmatprep.subr.bf16.mxu0 0
  %293 = vmatpush2.bf16.msra.mxu0 0
  %294 = vmatprep.subr.bf16.mxu0 0
  %295 = vmatpush2.bf16.msra.mxu0 0
  %296 = vmatprep.subr.bf16.mxu0 0
  %297 = vmatpush2.bf16.msra.mxu0 0
  %298 = vmatprep.subr.bf16.mxu0 0
  %299 = vmatpush2.bf16.msra.mxu0 0
  %300 = vmatprep.subr.bf16.mxu0 0
  %301 = vmatpush2.bf16.msra.mxu0 0
  %302 = vmatprep.mubr.bf16.mxu0 0
  %303 = vmatmul.mubr.bf16.gmra.mxu0 %v268
  %v304 = vpop.f32.mrf.mxu0
  %v305 = vadd.f32 0.0, %v304
  %v306 = vpop.f32.mrf.mxu0
  %v307 = vpop.f32.mrf.mxu0
  %v308 = vpop.f32.mrf.mxu0
  %309 = vdwg.mxu0
  %v310 = vpack.c.bf16 %v305, %v305
  %311 = vst.msk [vmem:[#allocation2 + $0x4] sm:$0xf] %vm81, %v310
  %312 = vset.pattern.permute.xlu0 5
  %313 = vperm.xlu0 %312, %v18
  %v314 = vpop.permute.xlu0 %313
  %vm315 = vcmp.eq.s32.totalorder %v314, %v22
  %v316 = vsel %vm315, 1, 0
  %v317 = vcvt.s32.f32 %v316
  %v318 = vpack.c.bf16 %v317, %v317
  %v320 = vsel %vm36, %v318, 0
  %322 = vmatprep.subr.bf16.mxu0 0
  %323 = vmatpush1.bf16.msra.mxu0 0
  %324 = vmatprep.subr.bf16.mxu0 0
  %325 = vmatpush1.bf16.msra.mxu0 0
  %326 = vmatprep.subr.bf16.mxu0 0
  %327 = vmatpush1.bf16.msra.mxu0 0
  %328 = vmatprep.subr.bf16.mxu0 0
  %329 = vmatpush1.bf16.msra.mxu0 0
  %330 = vmatprep.subr.bf16.mxu0 0
  %331 = vmatpush1.bf16.msra.mxu0 0
  %332 = vmatprep.subr.bf16.mxu0 0
  %333 = vmatpush1.bf16.msra.mxu0 0
  %334 = vmatprep.subr.bf16.mxu0 0
  %335 = vmatpush1.bf16.msra.mxu0 0
  %336 = vmatprep.subr.bf16.mxu0 0
  %337 = vmatpush1.bf16.msra.mxu0 %v34
  %338 = vmatprep.subr.bf16.mxu0 0
  %339 = vmatpush2.bf16.msra.mxu0 0
  %340 = vmatprep.subr.bf16.mxu0 0
  %341 = vmatpush2.bf16.msra.mxu0 0
  %342 = vmatprep.subr.bf16.mxu0 0
  %343 = vmatpush2.bf16.msra.mxu0 0
  %344 = vmatprep.subr.bf16.mxu0 0
  %345 = vmatpush2.bf16.msra.mxu0 0
  %346 = vmatprep.subr.bf16.mxu0 0
  %347 = vmatpush2.bf16.msra.mxu0 0
  %348 = vmatprep.subr.bf16.mxu0 0
  %349 = vmatpush2.bf16.msra.mxu0 0
  %350 = vmatprep.subr.bf16.mxu0 0
  %351 = vmatpush2.bf16.msra.mxu0 0
  %352 = vmatprep.subr.bf16.mxu0 0
  %353 = vmatpush2.bf16.msra.mxu0 0
  %354 = vmatprep.mubr.bf16.mxu0 0
  %355 = vmatmul.mubr.bf16.gmra.mxu0 %v320
  %v356 = vpop.f32.mrf.mxu0
  %v357 = vadd.f32 0.0, %v356
  %v358 = vpop.f32.mrf.mxu0
  %v359 = vpop.f32.mrf.mxu0
  %v360 = vpop.f32.mrf.mxu0
  %361 = vdwg.mxu0
  %v362 = vpack.c.bf16 %v357, %v357
  %v364 = vunpack.c.l.b16 %v362
  %v365 = vpack.c.b16 %v364, %v364
  %366 = vrot.lane.b32.xlu0 %v365, 32
  %v367 = vpop.permute.xlu0 %366
  %369 = vst.msk [vmem:[#allocation2 + $0x4] sm:$0xf] %vm140, %v367
  %370 = vset.pattern.permute.xlu0 6
  %371 = vperm.xlu0 %370, %v18
  %v372 = vpop.permute.xlu0 %371
  %vm373 = vcmp.eq.s32.totalorder %v372, %v22
  %v374 = vsel %vm373, 1, 0
  %v375 = vcvt.s32.f32 %v374
  %v376 = vpack.c.bf16 %v375, %v375
  %v378 = vsel %vm36, %v376, 0
  %380 = vmatprep.subr.bf16.mxu0 0
  %381 = vmatpush1.bf16.msra.mxu0 0
  %382 = vmatprep.subr.bf16.mxu0 0
  %383 = vmatpush1.bf16.msra.mxu0 0
  %384 = vmatprep.subr.bf16.mxu0 0
  %385 = vmatpush1.bf16.msra.mxu0 0
  %386 = vmatprep.subr.bf16.mxu0 0
  %387 = vmatpush1.bf16.msra.mxu0 0
  %388 = vmatprep.subr.bf16.mxu0 0
  %389 = vmatpush1.bf16.msra.mxu0 0
  %390 = vmatprep.subr.bf16.mxu0 0
  %391 = vmatpush1.bf16.msra.mxu0 0
  %392 = vmatprep.subr.bf16.mxu0 0
  %393 = vmatpush1.bf16.msra.mxu0 0
  %394 = vmatprep.subr.bf16.mxu0 0
  %395 = vmatpush1.bf16.msra.mxu0 %v34
  %396 = vmatprep.subr.bf16.mxu0 0
  %397 = vmatpush2.bf16.msra.mxu0 0
  %398 = vmatprep.subr.bf16.mxu0 0
  %399 = vmatpush2.bf16.msra.mxu0 0
  %400 = vmatprep.subr.bf16.mxu0 0
  %401 = vmatpush2.bf16.msra.mxu0 0
  %402 = vmatprep.subr.bf16.mxu0 0
  %403 = vmatpush2.bf16.msra.mxu0 0
  %404 = vmatprep.subr.bf16.mxu0 0
  %405 = vmatpush2.bf16.msra.mxu0 0
  %406 = vmatprep.subr.bf16.mxu0 0
  %407 = vmatpush2.bf16.msra.mxu0 0
  %408 = vmatprep.subr.bf16.mxu0 0
  %409 = vmatpush2.bf16.msra.mxu0 0
  %410 = vmatprep.subr.bf16.mxu0 0
  %411 = vmatpush2.bf16.msra.mxu0 0
  %412 = vmatprep.mubr.bf16.mxu0 0
  %413 = vmatmul.mubr.bf16.gmra.mxu0 %v378
  %v414 = vpop.f32.mrf.mxu0
  %v415 = vadd.f32 0.0, %v414
  %v416 = vpop.f32.mrf.mxu0
  %v417 = vpop.f32.mrf.mxu0
  %v418 = vpop.f32.mrf.mxu0
  %419 = vdwg.mxu0
  %v420 = vpack.c.bf16 %v415, %v415
  %v422 = vunpack.c.l.b16 %v420
  %v423 = vpack.c.b16 %v422, %v422
  %424 = vrot.lane.b32.xlu0 %v423, 64
  %v425 = vpop.permute.xlu0 %424
  %427 = vst.msk [vmem:[#allocation2 + $0x4] sm:$0xf] %vm199, %v425
  %428 = vset.pattern.permute.xlu0 7
  %429 = vperm.xlu0 %428, %v18
  %v430 = vpop.permute.xlu0 %429
  %vm431 = vcmp.eq.s32.totalorder %v430, %v22
  %v432 = vsel %vm431, 1, 0
  %v433 = vcvt.s32.f32 %v432
  %v434 = vpack.c.bf16 %v433, %v433
  %v436 = vsel %vm36, %v434, 0
  %438 = vmatprep.subr.bf16.mxu0 0
  %439 = vmatpush1.bf16.msra.mxu0 0
  %440 = vmatprep.subr.bf16.mxu0 0
  %441 = vmatpush1.bf16.msra.mxu0 0
  %442 = vmatprep.subr.bf16.mxu0 0
  %443 = vmatpush1.bf16.msra.mxu0 0
  %444 = vmatprep.subr.bf16.mxu0 0
  %445 = vmatpush1.bf16.msra.mxu0 0
  %446 = vmatprep.subr.bf16.mxu0 0
  %447 = vmatpush1.bf16.msra.mxu0 0
  %448 = vmatprep.subr.bf16.mxu0 0
  %449 = vmatpush1.bf16.msra.mxu0 0
  %450 = vmatprep.subr.bf16.mxu0 0
  %451 = vmatpush1.bf16.msra.mxu0 0
  %452 = vmatprep.subr.bf16.mxu0 0
  %453 = vmatpush1.bf16.msra.mxu0 %v34
  %454 = vmatprep.subr.bf16.mxu0 0
  %455 = vmatpush2.bf16.msra.mxu0 0
  %456 = vmatprep.subr.bf16.mxu0 0
  %457 = vmatpush2.bf16.msra.mxu0 0
  %458 = vmatprep.subr.bf16.mxu0 0
  %459 = vmatpush2.bf16.msra.mxu0 0
  %460 = vmatprep.subr.bf16.mxu0 0
  %461 = vmatpush2.bf16.msra.mxu0 0
  %462 = vmatprep.subr.bf16.mxu0 0
  %463 = vmatpush2.bf16.msra.mxu0 0
  %464 = vmatprep.subr.bf16.mxu0 0
  %465 = vmatpush2.bf16.msra.mxu0 0
  %466 = vmatprep.subr.bf16.mxu0 0
  %467 = vmatpush2.bf16.msra.mxu0 0
  %468 = vmatprep.subr.bf16.mxu0 0
  %469 = vmatpush2.bf16.msra.mxu0 0
  %470 = vmatprep.mubr.bf16.mxu0 0
  %471 = vmatmul.mubr.bf16.gmra.mxu0 %v436
  %v472 = vpop.f32.mrf.mxu0
  %v473 = vadd.f32 0.0, %v472
  %v474 = vpop.f32.mrf.mxu0
  %v475 = vpop.f32.mrf.mxu0
  %v476 = vpop.f32.mrf.mxu0
  %477 = vdwg.mxu0
  %v478 = vpack.c.bf16 %v473, %v473
  %v480 = vunpack.c.l.b16 %v478
  %v481 = vpack.c.b16 %v480, %v480
  %482 = vrot.lane.b32.xlu0 %v481, 96
  %v483 = vpop.permute.xlu0 %482
  %485 = vst.msk [vmem:[#allocation2 + $0x4] sm:$0xf] %vm258, %v483
  %v486 = vld [vmem:[#allocation2] sm:$0xff]
  %v487 = vld [vmem:[%s2] sm:$0xf]
  %v488 = vld [vmem:[%s2 + $0x4] sm:$0xf]
  %v489 = vld [vmem:[%s2 + $0x8] sm:$0xf]
  %v490 = vld [vmem:[%s2 + $0xc] sm:$0xf]
  %v491 = vld [vmem:[%s2 + $0x10] sm:$0xf]
  %v492 = vld [vmem:[%s2 + $0x14] sm:$0xf]
  %v493 = vld [vmem:[%s2 + $0x18] sm:$0xf]
  %v494 = vld [vmem:[%s2 + $0x1c] sm:$0xf]
  %v495 = vld [vmem:[%s2 + $0x20] sm:$0xf]
  %v496 = vld [vmem:[%s2 + $0x24] sm:$0xf]
  %v497 = vld [vmem:[%s2 + $0x28] sm:$0xf]
  %v498 = vld [vmem:[%s2 + $0x2c] sm:$0xf]
  %v499 = vld [vmem:[%s2 + $0x30] sm:$0xf]
  %v500 = vld [vmem:[%s2 + $0x34] sm:$0xf]
  %v501 = vld [vmem:[%s2 + $0x38] sm:$0xf]
  %v502 = vld [vmem:[%s2 + $0x3c] sm:$0xf]
  %v503 = vld [vmem:[%s2 + $0x40] sm:$0xf]
  %v504 = vld [vmem:[%s2 + $0x44] sm:$0xf]
  %v505 = vld [vmem:[%s2 + $0x48] sm:$0xf]
  %v506 = vld [vmem:[%s2 + $0x4c] sm:$0xf]
  %v507 = vld [vmem:[%s2 + $0x50] sm:$0xf]
  %v508 = vld [vmem:[%s2 + $0x54] sm:$0xf]
  %v509 = vld [vmem:[%s2 + $0x58] sm:$0xf]
  %v510 = vld [vmem:[%s2 + $0x5c] sm:$0xf]
  %v511 = vld [vmem:[%s2 + $0x60] sm:$0xf]
  %v512 = vld [vmem:[%s2 + $0x64] sm:$0xf]
  %v513 = vld [vmem:[%s2 + $0x68] sm:$0xf]
  %v514 = vld [vmem:[%s2 + $0x6c] sm:$0xf]
  %v515 = vld [vmem:[%s2 + $0x70] sm:$0xf]
  %v516 = vld [vmem:[%s2 + $0x74] sm:$0xf]
  %v517 = vld [vmem:[%s2 + $0x78] sm:$0xf]
  %v518 = vld [vmem:[%s2 + $0x7c] sm:$0xf]
  %v519 = vld [vmem:[%s3] sm:$0x1]
  %v521 = vlaneseq
  %v522 = vshrl.u32 %v521, 7
  %v523 = vsub.s32 0, %v522
  %v524 = vrot.slane %v519, %v523
  %v527 = vunpack.c.l.b16 %v486
  %v528 = vunpack.c.h.b16 %v486
  %v529 = vpack.c.b16 %v527, %v527
  %v530 = vpack.c.b16 %v528, %v528
  %v565 = vunpack.c.l.b16 %v487
  %v566 = vunpack.c.l.b16 %v488
  %v567 = vunpack.c.l.b16 %v489
  %v568 = vunpack.c.l.b16 %v490
  %v569 = vunpack.c.l.b16 %v491
  %v570 = vunpack.c.l.b16 %v492
  %v571 = vunpack.c.l.b16 %v493
  %v572 = vunpack.c.l.b16 %v494
  %v573 = vunpack.c.l.b16 %v495
  %v574 = vunpack.c.l.b16 %v496
  %v575 = vunpack.c.l.b16 %v497
  %v576 = vunpack.c.l.b16 %v498
  %v577 = vunpack.c.l.b16 %v499
  %v578 = vunpack.c.l.b16 %v500
  %v579 = vunpack.c.l.b16 %v501
  %v580 = vunpack.c.l.b16 %v502
  %v581 = vunpack.c.l.b16 %v503
  %v582 = vunpack.c.l.b16 %v504
  %v583 = vunpack.c.l.b16 %v505
  %v584 = vunpack.c.l.b16 %v506
  %v585 = vunpack.c.l.b16 %v507
  %v586 = vunpack.c.l.b16 %v508
  %v587 = vunpack.c.l.b16 %v509
  %v588 = vunpack.c.l.b16 %v510
  %v589 = vunpack.c.l.b16 %v511
  %v590 = vunpack.c.l.b16 %v512
  %v591 = vunpack.c.l.b16 %v513
  %v592 = vunpack.c.l.b16 %v514
  %v593 = vunpack.c.l.b16 %v515
  %v594 = vunpack.c.l.b16 %v516
  %v595 = vunpack.c.l.b16 %v517
  %v596 = vunpack.c.l.b16 %v518
  %v597 = vpack.c.b16 %v566, %v565
  %v598 = vpack.c.b16 %v568, %v567
  %v599 = vpack.c.b16 %v570, %v569
  %v600 = vpack.c.b16 %v572, %v571
  %v601 = vpack.c.b16 %v574, %v573
  %v602 = vpack.c.b16 %v576, %v575
  %v603 = vpack.c.b16 %v578, %v577
  %v604 = vpack.c.b16 %v580, %v579
  %v605 = vpack.c.b16 %v582, %v581
  %v606 = vpack.c.b16 %v584, %v583
  %v607 = vpack.c.b16 %v586, %v585
  %v608 = vpack.c.b16 %v588, %v587
  %v609 = vpack.c.b16 %v590, %v589
  %v610 = vpack.c.b16 %v592, %v591
  %v611 = vpack.c.b16 %v594, %v593
  %v612 = vpack.c.b16 %v596, %v595
  %629 = vmatprep.subr.bf16.mxu0 0
  %630 = vmatpush1.bf16.msra.mxu0 %v604
  %631 = vmatprep.subr.bf16.mxu0 0
  %632 = vmatpush1.bf16.msra.mxu0 %v603
  %633 = vmatprep.subr.bf16.mxu0 0
  %634 = vmatpush1.bf16.msra.mxu0 %v602
  %635 = vmatprep.subr.bf16.mxu0 0
  %636 = vmatpush1.bf16.msra.mxu0 %v601
  %637 = vmatprep.subr.bf16.mxu0 0
  %638 = vmatpush1.bf16.msra.mxu0 %v600
  %639 = vmatprep.subr.bf16.mxu0 0
  %640 = vmatpush1.bf16.msra.mxu0 %v599
  %641 = vmatprep.subr.bf16.mxu0 0
  %642 = vmatpush1.bf16.msra.mxu0 %v598
  %643 = vmatprep.subr.bf16.mxu0 0
  %644 = vmatpush1.bf16.msra.mxu0 %v597
  %645 = vmatprep.subr.bf16.mxu0 0
  %646 = vmatpush2.bf16.msra.mxu0 %v612
  %647 = vmatprep.subr.bf16.mxu0 0
  %648 = vmatpush2.bf16.msra.mxu0 %v611
  %649 = vmatprep.subr.bf16.mxu0 0
  %650 = vmatpush2.bf16.msra.mxu0 %v610
  %651 = vmatprep.subr.bf16.mxu0 0
  %652 = vmatpush2.bf16.msra.mxu0 %v609
  %653 = vmatprep.subr.bf16.mxu0 0
  %654 = vmatpush2.bf16.msra.mxu0 %v608
  %655 = vmatprep.subr.bf16.mxu0 0
  %656 = vmatpush2.bf16.msra.mxu0 %v607
  %657 = vmatprep.subr.bf16.mxu0 0
  %658 = vmatpush2.bf16.msra.mxu0 %v606
  %659 = vmatprep.subr.bf16.mxu0 0
  %660 = vmatpush2.bf16.msra.mxu0 %v605
  %661 = vmatprep.mubr.bf16.mxu0 %v530
  %662 = vmatmul.mubr.bf16.gmra.mxu0 %v529
  %v663 = vpop.f32.mrf.mxu0
  %v664 = vadd.f32 %v524, %v663
  %v665 = vpop.f32.mrf.mxu0
  %v666 = vpop.f32.mrf.mxu0
  %v667 = vpop.f32.mrf.mxu0
  %668 = vdwg.mxu0
  %vm669 = vcmask 15360
  %670 = vst.msk [vmem:[%s4] sm:$0xff] %vm669, %v664
  // Predicated region
  $region18: #{tpu_custom_call.1} parent=0 // pred_check
    _
  $region19: #{tpu_custom_call.1} parent=0 // pred_check_branch
    %672 = sbr.rel (0) target = $region21
  $region20: #{tpu_custom_call.1} parent=0 // pred_region
    _
  $region21: #{tpu_custom_call.1} parent=0 // pred_fallthru
    _
  // Predicated region
  $region22: #{tpu_custom_call.1} parent=0 // pred_check
    _
  $region23: #{tpu_custom_call.1} parent=0 // pred_check_branch
    %674 = sbr.rel (0) target = $region25
  $region24: #{tpu_custom_call.1} parent=0 // pred_region
    _
  $region25: #{tpu_custom_call.1} parent=0 // pred_fallthru
    _

</llo_original>
